<compile_context>
chip_gen: v7x
topology: tpu7x:2x2x1
jax: 0.10.0
libtpu: 0.0.40
codegen_flags: <defaults>
</compile_context>

<pallas_src>
import jax
import jax.numpy as jnp
from jax.experimental import pallas as pl
from jax.experimental.pallas import tpu as pltpu

IN_FEATURES = 10
HIDDEN = 32
OUT = 1
MAX_TB = 8192  # batch tile rows; fits comfortably in 32 MiB scoped VMEM


def _round_up(n, m):
    return ((n + m - 1) // m) * m


def _pick_tile(B):
    """Pick the batch tile size.

    - small B: a single tile equal to the full batch (block == array dims, so
      any B is a legal block shape).
    - mid B:   two balanced tiles (rounded to 128 so the lane-dense output
               block stays 128-aligned) -> even megacore split on v7x.
    - large B: MAX_TB tiles; last tile may be ragged (handled by Pallas).
    """
    if B <= 1024:
        return B
    if B <= 2 * MAX_TB:
        return _round_up((B + 1) // 2, 128)
    return MAX_TB


def _disc_kernel(x_ref, w1_ref, b1_ref, w2_ref, b2_ref, w3_ref, b3_ref, o_ref):
    # Layer 1 (MXU): (tb, 10) @ (10, 32) + b1, ReLU.
    h = jnp.dot(x_ref[...], w1_ref[...], preferred_element_type=jnp.float32)
    h = jnp.maximum(h + b1_ref[...], 0.0)
    # Layer 2 (MXU): (tb, 32) @ (32, 32) + b2, ReLU.
    h = jnp.dot(h, w2_ref[...], preferred_element_type=jnp.float32)
    h = jnp.maximum(h + b2_ref[...], 0.0)
    # Layer 3 computed transposed so the result is lane-dense (1, tb):
    #   ht: (32, tb) via XLU transpose; VPU multiply by w3 (32, 1);
    #   XLU sublane reduce over the 32 features -> (1, tb).
    ht = jnp.transpose(h)
    y = jnp.sum(ht * w3_ref[...], axis=0, keepdims=True) + b3_ref[...]
    # Sigmoid: exp on the otherwise-idle EUP slot; exact divide keeps the
    # result bit-close to jax.nn.sigmoid.  (pl.reciprocal(..., approx=True)
    # would also put the reciprocal on EUP at ~1e-4 accuracy cost.)
    o_ref[...] = 1.0 / (1.0 + jnp.exp(-y))


def shape_discriminator(x, w1, b1, w2, b2, w3, b3, *, tb=None):
    """x: (B, 10) f32; w1: (10, 32); b1: (32,); w2: (32, 32); b2: (32,);
    w3: (32, 1); b3: (1,).  Weights stored as (in, out)."""
    B = x.shape[0]
    if tb is None:
        tb = _pick_tile(B)
    num_tiles = pl.cdiv(B, tb)

    b1_2d = b1.reshape(1, HIDDEN)
    b2_2d = b2.reshape(1, HIDDEN)
    w3_col = w3.reshape(HIDDEN, OUT)   # (32, 1); only valid as-is because OUT == 1
    b3_2d = b3.reshape(1, OUT)

    out = pl.pallas_call(
        _disc_kernel,
        # Lane-dense output: one (1, tb) row per grid step, reshaped to (B, 1)
        # in the wrapper (contiguous reshape + tiny slice).
        out_shape=jax.ShapeDtypeStruct((1, num_tiles * tb), jnp.float32),
        grid_spec=pltpu.PrefetchScalarGridSpec(
            num_scalar_prefetch=0,
            grid=(num_tiles,),
            in_specs=[
                pl.BlockSpec((tb, IN_FEATURES), lambda i: (i, 0)),       # x tile
                pl.BlockSpec((IN_FEATURES, HIDDEN), lambda i: (0, 0)),   # w1 resident
                pl.BlockSpec((1, HIDDEN), lambda i: (0, 0)),             # b1
                pl.BlockSpec((HIDDEN, HIDDEN), lambda i: (0, 0)),        # w2 resident
                pl.BlockSpec((1, HIDDEN), lambda i: (0, 0)),             # b2
                pl.BlockSpec((HIDDEN, OUT), lambda i: (0, 0)),           # w3 column
                pl.BlockSpec((1, OUT), lambda i: (0, 0)),                # b3
            ],
            out_specs=pl.BlockSpec((1, tb), lambda i: (0, i)),
        ),
        compiler_params=pltpu.CompilerParams(
            dimension_semantics=("parallel",),        # megacore sharding on v7x
            vmem_limit_bytes=32 * 1024 * 1024,        # covers v5e's 16 MiB default
        ),
    )(x, w1, b1_2d, w2, b2_2d, w3_col, b3_2d)
    return out.reshape(-1)[:B].reshape(B, OUT)


def init_params(key):
    """Deterministic init mimicking PyTorch's default U(-1/sqrt(fan_in), ...)."""
    k1, k2, k3, k4, k5, k6 = jax.random.split(key, 6)
    bound1 = 1.0 / jnp.sqrt(IN_FEATURES)
    bound2 = 1.0 / jnp.sqrt(HIDDEN)
    # stored as (in, out) = transpose of PyTorch's (out, in) weight layout
    w1 = jax.random.uniform(k1, (IN_FEATURES, HIDDEN), jnp.float32, -bound1, bound1)
    b1 = jax.random.uniform(k2, (HIDDEN,), jnp.float32, -bound1, bound1)
    w2 = jax.random.uniform(k3, (HIDDEN, HIDDEN), jnp.float32, -bound2, bound2)
    b2 = jax.random.uniform(k4, (HIDDEN,), jnp.float32, -bound2, bound2)
    w3 = jax.random.uniform(k5, (HIDDEN, OUT), jnp.float32, -bound2, bound2)
    b3 = jax.random.uniform(k6, (OUT,), jnp.float32, -bound2, bound2)
    return w1, b1, w2, b2, w3, b3


if __name__ == "__main__":
    key = jax.random.PRNGKey(0)
    kx, kp, kx2 = jax.random.split(key, 3)
    w1, b1, w2, b2, w3, b3 = init_params(kp)

    def ref_fn(xx):
        h = jnp.maximum(xx @ w1 + b1, 0.0)
        h = jnp.maximum(h @ w2 + b2, 0.0)
        return jax.nn.sigmoid(h @ w3 + b3)

    # Case 1: small batch, single tile (block == full array dims).
    B = 8
    x = jax.random.normal(kx, (B, IN_FEATURES), dtype=jnp.float32)
    out = jax.block_until_ready(shape_discriminator(x, w1, b1, w2, b2, w3, b3))
    assert out.shape == (B, OUT)
    assert jnp.allclose(out, ref_fn(x), atol=1e-5, rtol=1e-5)

    # Case 2: multi-tile with a ragged final tile (exercises the cdiv grid,
    # lane-dense (1, tb) output blocks, and discarded garbage rows).
    B2 = 300
    x2 = jax.random.normal(kx2, (B2, IN_FEATURES), dtype=jnp.float32)
    out2 = jax.block_until_ready(
        shape_discriminator(x2, w1, b1, w2, b2, w3, b3, tb=128))
    assert out2.shape == (B2, OUT)
    assert jnp.allclose(out2, ref_fn(x2), atol=1e-5, rtol=1e-5)

    print("KERNEL_OK")
</pallas_src>

<mosaic_0001>
module attributes {stable_mosaic.version = 11 : i64} {
  func.func @_disc_kernel(%arg0: i32, %arg1: memref<8x10xf32, #tpu.memory_space<vmem>>, %arg2: memref<10x32xf32, #tpu.memory_space<vmem>>, %arg3: memref<1x32xf32, #tpu.memory_space<vmem>>, %arg4: memref<32x32xf32, #tpu.memory_space<vmem>>, %arg5: memref<1x32xf32, #tpu.memory_space<vmem>>, %arg6: memref<32x1xf32, #tpu.memory_space<vmem>>, %arg7: memref<1x1xf32, #tpu.memory_space<vmem>>, %arg8: memref<1x8xf32, #tpu.memory_space<vmem>>) attributes {dimension_semantics = [#tpu.dimension_semantics<parallel>], iteration_bounds = array<i64: 1>, scalar_prefetch = 0 : i64, scratch_operands = 0 : i64, tpu.core_type = #tpu.core_type<tc>, window_params = [{transform_indices = @transform_0, window_bounds = array<i64: 8, 10>}, {pipeline_mode = #tpu.pipeline_mode<synchronous>, transform_indices = @transform_1, window_bounds = array<i64: 10, 32>}, {pipeline_mode = #tpu.pipeline_mode<synchronous>, transform_indices = @transform_2, window_bounds = array<i64: 1, 32>}, {pipeline_mode = #tpu.pipeline_mode<synchronous>, transform_indices = @transform_3, window_bounds = array<i64: 32, 32>}, {pipeline_mode = #tpu.pipeline_mode<synchronous>, transform_indices = @transform_4, window_bounds = array<i64: 1, 32>}, {pipeline_mode = #tpu.pipeline_mode<synchronous>, transform_indices = @transform_5, window_bounds = array<i64: 32, 1>}, {pipeline_mode = #tpu.pipeline_mode<synchronous>, transform_indices = @transform_6, window_bounds = array<i64: 1, 1>}, {transform_indices = @transform_7, window_bounds = array<i64: 1, 8>}]} {
    %c0 = arith.constant 0 : index
    %c0_0 = arith.constant 0 : index
    %0 = vector.load %arg1[%c0, %c0_0] : memref<8x10xf32, #tpu.memory_space<vmem>>, vector<8x10xf32>
    %c0_1 = arith.constant 0 : index
    %c0_2 = arith.constant 0 : index
    %1 = vector.load %arg2[%c0_1, %c0_2] : memref<10x32xf32, #tpu.memory_space<vmem>>, vector<10x32xf32>
    %cst = arith.constant dense<0.000000e+00> : vector<8x32xf32>
    %2 = tpu.matmul %0, %1, %cst {dimension_numbers = #tpu.dot_dimension_numbers<[1], [0], [0], [1], [0, 0, 1, 1], [], []>} : vector<8x10xf32>, vector<10x32xf32>, vector<8x32xf32> -> vector<8x32xf32>
    %c0_3 = arith.constant 0 : index
    %c0_4 = arith.constant 0 : index
    %3 = vector.load %arg3[%c0_3, %c0_4] : memref<1x32xf32, #tpu.memory_space<vmem>>, vector<1x32xf32>
    %4 = vector.broadcast %3 : vector<1x32xf32> to vector<8x32xf32>
    %5 = arith.addf %2, %4 : vector<8x32xf32>
    %cst_5 = arith.constant 0.000000e+00 : f32
    %6 = vector.broadcast %cst_5 : f32 to vector<8x32xf32>
    %7 = arith.maximumf %5, %6 : vector<8x32xf32>
    %c0_6 = arith.constant 0 : index
    %c0_7 = arith.constant 0 : index
    %8 = vector.load %arg4[%c0_6, %c0_7] : memref<32x32xf32, #tpu.memory_space<vmem>>, vector<32x32xf32>
    %cst_8 = arith.constant dense<0.000000e+00> : vector<8x32xf32>
    %9 = tpu.matmul %7, %8, %cst_8 {dimension_numbers = #tpu.dot_dimension_numbers<[1], [0], [0], [1], [0, 0, 1, 1], [], []>} : vector<8x32xf32>, vector<32x32xf32>, vector<8x32xf32> -> vector<8x32xf32>
    %c0_9 = arith.constant 0 : index
    %c0_10 = arith.constant 0 : index
    %10 = vector.load %arg5[%c0_9, %c0_10] : memref<1x32xf32, #tpu.memory_space<vmem>>, vector<1x32xf32>
    %11 = vector.broadcast %10 : vector<1x32xf32> to vector<8x32xf32>
    %12 = arith.addf %9, %11 : vector<8x32xf32>
    %cst_11 = arith.constant 0.000000e+00 : f32
    %13 = vector.broadcast %cst_11 : f32 to vector<8x32xf32>
    %14 = arith.maximumf %12, %13 : vector<8x32xf32>
    %15 = tpu.transpose %14, [1, 0] : vector<8x32xf32> -> vector<32x8xf32>
    %c0_12 = arith.constant 0 : index
    %c0_13 = arith.constant 0 : index
    %16 = vector.load %arg6[%c0_12, %c0_13] : memref<32x1xf32, #tpu.memory_space<vmem>>, vector<32x1xf32>
    %17 = vector.broadcast %16 : vector<32x1xf32> to vector<32x8xf32>
    %18 = arith.mulf %15, %17 : vector<32x8xf32>
    %cst_14 = arith.constant dense<0.000000e+00> : vector<8xf32>
    %19 = vector.multi_reduction <add>, %18, %cst_14 [0] : vector<32x8xf32> to vector<8xf32>
    %20 = vector.shape_cast %19 : vector<8xf32> to vector<1x8xf32>
    %c0_15 = arith.constant 0 : index
    %c0_16 = arith.constant 0 : index
    %21 = vector.load %arg7[%c0_15, %c0_16] : memref<1x1xf32, #tpu.memory_space<vmem>>, vector<1x1xf32>
    %22 = vector.broadcast %21 : vector<1x1xf32> to vector<1x8xf32>
    %23 = arith.addf %20, %22 : vector<1x8xf32>
    %cst_17 = arith.constant 0.000000e+00 : f32
    %24 = vector.broadcast %cst_17 : f32 to vector<1x8xf32>
    %25 = arith.subf %24, %23 : vector<1x8xf32>
    %26 = math.exp %25 : vector<1x8xf32>
    %cst_18 = arith.constant 1.000000e+00 : f32
    %27 = vector.broadcast %cst_18 : f32 to vector<1x8xf32>
    %28 = arith.addf %27, %26 : vector<1x8xf32>
    %cst_19 = arith.constant 1.000000e+00 : f32
    %29 = vector.broadcast %cst_19 : f32 to vector<1x8xf32>
    %30 = arith.divf %29, %28 : vector<1x8xf32>
    %c0_20 = arith.constant 0 : index
    %c0_21 = arith.constant 0 : index
    %31 = vector.load %arg8[%c0_20, %c0_21] : memref<1x8xf32, #tpu.memory_space<vmem>>, vector<1x8xf32>
    tpu.vector_store %arg8[%c0_20, %c0_21], %30 {strides = array<i32>} : memref<1x8xf32, #tpu.memory_space<vmem>>, vector<1x8xf32>,
    return
  }
  func.func @transform_0(%arg0: i32) -> (i32, i32) {
    %c0_i32 = arith.constant 0 : i32
    %c0_i32_0 = arith.constant 0 : i32
    return %arg0, %c0_i32 : i32, i32
  }
  func.func @transform_1(%arg0: i32) -> (i32, i32) {
    %c0_i32 = arith.constant 0 : i32
    %c0_i32_0 = arith.constant 0 : i32
    %c0_i32_1 = arith.constant 0 : i32
    return %c0_i32, %c0_i32_0 : i32, i32
  }
  func.func @transform_2(%arg0: i32) -> (i32, i32) {
    %c0_i32 = arith.constant 0 : i32
    %c0_i32_0 = arith.constant 0 : i32
    %c0_i32_1 = arith.constant 0 : i32
    return %c0_i32, %c0_i32_0 : i32, i32
  }
  func.func @transform_3(%arg0: i32) -> (i32, i32) {
    %c0_i32 = arith.constant 0 : i32
    %c0_i32_0 = arith.constant 0 : i32
    %c0_i32_1 = arith.constant 0 : i32
    return %c0_i32, %c0_i32_0 : i32, i32
  }
  func.func @transform_4(%arg0: i32) -> (i32, i32) {
    %c0_i32 = arith.constant 0 : i32
    %c0_i32_0 = arith.constant 0 : i32
    %c0_i32_1 = arith.constant 0 : i32
    return %c0_i32, %c0_i32_0 : i32, i32
  }
  func.func @transform_5(%arg0: i32) -> (i32, i32) {
    %c0_i32 = arith.constant 0 : i32
    %c0_i32_0 = arith.constant 0 : i32
    %c0_i32_1 = arith.constant 0 : i32
    return %c0_i32, %c0_i32_0 : i32, i32
  }
  func.func @transform_6(%arg0: i32) -> (i32, i32) {
    %c0_i32 = arith.constant 0 : i32
    %c0_i32_0 = arith.constant 0 : i32
    %c0_i32_1 = arith.constant 0 : i32
    return %c0_i32, %c0_i32_0 : i32, i32
  }
  func.func @transform_7(%arg0: i32) -> (i32, i32) {
    %c0_i32 = arith.constant 0 : i32
    %c0_i32_0 = arith.constant 0 : i32
    return %c0_i32, %arg0 : i32, i32
  }
}

</mosaic_0001>

<llo_original>
// kernel: tpu_custom_call.1
$region0: #{tpu_custom_call.1}
  #allocation0 [shape = 'u32[]', space=smem, size = 0x4, offset = 0x4, fixed_abs, tag = 'smem constant byte address 0x4 - core index']
  #allocation1 [shape = 'u32[144,128]{1,0:T(1,128)}', space=vmem, size = 0x12000, scoped, tag = 'internal scratch']
  #allocation2 [shape = 'f32[1,1]{1,0:T(1,128)S(1)}', space=vmem, size = 0x200, scoped, tag = 'scoped memory for tpu_custom_call.1']
  %s0 = inlined_call_operand.hbm [shape: f32[8,10], index: 0, kind: input, shape index: {}]
  %s1 = inlined_call_operand.vmem [shape: f32[10,32], index: 1, kind: input, shape index: {}]
  %s2 = inlined_call_operand.hbm [shape: f32[1,32], index: 2, kind: input, shape index: {}]
  %s3 = inlined_call_operand.vmem [shape: f32[32,32], index: 3, kind: input, shape index: {}]
  %s4 = inlined_call_operand.vmem [shape: f32[1,32], index: 4, kind: input, shape index: {}]
  %s5 = inlined_call_operand.vmem [shape: f32[32,1], index: 5, kind: input, shape index: {}]
  %s6 = inlined_call_operand.<no memory space> [shape: f32[1,1], index: 6, kind: input, shape index: {}]
  %s7 = inlined_call_operand.hbm [shape: f32[1,8], index: 7, kind: output, shape index: {}]
  %s8 = sld [smem:[#allocation0]]
  $region46: #{tpu_custom_call.1} parent=0
    _
  %s10 = ssub.s32 1, %s8
  %s11 = scalar_select 0, %s10, %s8
  %v12 = vstv %s6
  %13 = vst [vmem:[#allocation2] sm:$0x1] %v12
  $region1: #{tpu_custom_call.1} parent=0
    #allocation3 [shape = 'u8[4096]{0}', space=vmem, size = 0x1000, scoped, tag = 'input window, operand 0, single buffered']
    #allocation4 [shape = 's32[1]{0}', space=sflag, size = 0x4, scoped, tag = 'scoped memory for tpu_custom_call.1']
    #allocation5 [shape = 's32[1]{0}', space=sflag, size = 0x4, scoped, tag = 'scoped memory for tpu_custom_call.1']
    #allocation6 [shape = 'u8[512]{0}', space=vmem, size = 0x400, scoped, tag = 'input window, operand 2, single buffered']
    #allocation7 [shape = 's32[1]{0}', space=sflag, size = 0x4, scoped, tag = 'scoped memory for tpu_custom_call.1']
    #allocation8 [shape = 'u8[512]{0}', space=vmem, size = 0x400, scoped, tag = 'output window, operand 0, single buffered']
    %14 = vsyncpa [#allocation4], 0
    %15 = vsyncpa [#allocation7], 0
    %16 = vsyncpa [#allocation5], 0
    // Predicated region
    $region2: #{tpu_custom_call.1} parent=1 // pred_check
      _
    $region3: #{tpu_custom_call.1} parent=1 // pred_check_branch
      %18 = sbr.rel (0) target = $region5
    $region4: #{tpu_custom_call.1} parent=1 // pred_region
      %s20 = ssub.s32 128, 128
      %21 = vsyncadd [#allocation4], %s20
      %s23 = sshll.u32 [#allocation3], 4
      %s24 = int_to_ptr.vmem [resolvable:$true] %s23
      %26 = dma.hbm_to_vmem [thread:$0]  %s0, 128, %s24, [#allocation4]
    $region5: #{tpu_custom_call.1} parent=1 // pred_fallthru
      _
    // Predicated region
    $region6: #{tpu_custom_call.1} parent=1 // pred_check
      _
    $region7: #{tpu_custom_call.1} parent=1 // pred_check_branch
      %28 = sbr.rel (0) target = $region9
    $region8: #{tpu_custom_call.1} parent=1 // pred_region
      _
    $region9: #{tpu_custom_call.1} parent=1 // pred_fallthru
      _
    // Predicated region
    $region10: #{tpu_custom_call.1} parent=1 // pred_check
      _
    $region11: #{tpu_custom_call.1} parent=1 // pred_check_branch
      %30 = sbr.rel (0) target = $region13
    $region12: #{tpu_custom_call.1} parent=1 // pred_region
      %s32 = ssub.s32 16, 16
      %33 = vsyncadd [#allocation7], %s32
      %s35 = sshll.u32 [#allocation6], 4
      %s36 = int_to_ptr.vmem [resolvable:$true] %s35
      %38 = dma.hbm_to_vmem [thread:$0]  %s2, 16, %s36, [#allocation7]
    $region13: #{tpu_custom_call.1} parent=1 // pred_fallthru
      _
    // Predicated region
    $region14: #{tpu_custom_call.1} parent=1 // pred_check
      _
    $region15: #{tpu_custom_call.1} parent=1 // pred_check_branch
      %40 = sbr.rel (0) target = $region17
    $region16: #{tpu_custom_call.1} parent=1 // pred_region
      _
    $region17: #{tpu_custom_call.1} parent=1 // pred_fallthru
      _
    // Predicated region
    $region18: #{tpu_custom_call.1} parent=1 // pred_check
      _
    $region19: #{tpu_custom_call.1} parent=1 // pred_check_branch
      %42 = sbr.rel (0) target = $region21
    $region20: #{tpu_custom_call.1} parent=1 // pred_region
      _
    $region21: #{tpu_custom_call.1} parent=1 // pred_fallthru
      _
    // Predicated region
    $region22: #{tpu_custom_call.1} parent=1 // pred_check
      _
    $region23: #{tpu_custom_call.1} parent=1 // pred_check_branch
      %44 = sbr.rel (0) target = $region25
    $region24: #{tpu_custom_call.1} parent=1 // pred_region
      _
    $region25: #{tpu_custom_call.1} parent=1 // pred_fallthru
      _
    // Predicated region
    $region26: #{tpu_custom_call.1} parent=1 // pred_check
      _
    $region27: #{tpu_custom_call.1} parent=1 // pred_check_branch
      %46 = sbr.rel (0) target = $region29
    $region28: #{tpu_custom_call.1} parent=1 // pred_region
      _
    $region29: #{tpu_custom_call.1} parent=1 // pred_fallthru
      _
    // Predicated region
    $region30: #{tpu_custom_call.1} parent=1 // pred_check
      _
    $region31: #{tpu_custom_call.1} parent=1 // pred_check_branch
      %48 = sbr.rel (0) target = $region33
    $region32: #{tpu_custom_call.1} parent=1 // pred_region
      %49 = dma.done [#allocation4], 128
    $region33: #{tpu_custom_call.1} parent=1 // pred_fallthru
      _
    // Predicated region
    $region34: #{tpu_custom_call.1} parent=1 // pred_check
      _
    $region35: #{tpu_custom_call.1} parent=1 // pred_check_branch
      %51 = sbr.rel (0) target = $region37
    $region36: #{tpu_custom_call.1} parent=1 // pred_region
      %52 = dma.done [#allocation7], 16
    $region37: #{tpu_custom_call.1} parent=1 // pred_fallthru
      _
    %v53 = vld [vmem:[#allocation3] sm:$0xff]
    %v54 = vld [vmem:[%s1] sm:$0xff]
    %v55 = vld [vmem:[%s1 + $0x8] sm:$0x3]
    %v56 = vld [vmem:[#allocation6] sm:$0x1]
    %v58 = vlaneseq
    %v59 = vshrl.u32 %v58, 7
    %v60 = vsub.s32 0, %v59
    %v61 = vrot.slane %v56, %v60
    %vm63 = vcmask 80896
    %v65 = vsel %vm63, %v53, 0
    %vm67 = vcmask 1041408
    %v69 = vsel %vm67, %v55, 0
    %71 = vmatprep.subr.mxu0 0.0
    %72 = vmatpush1.msra.mxu0 %v54
    %73 = vmatprep.subr.mxu0 0.0
    %74 = vmatpush1.msra.mxu0 %v69
    %75 = vmatprep.subr.mxu0 0.0
    %76 = vmatpush1.msra.mxu0 0.0
    %77 = vmatprep.subr.mxu0 0.0
    %78 = vmatpush1.msra.mxu0 0.0
    %79 = vmatprep.subr.mxu0 0.0
    %80 = vmatpush1.msra.mxu0 0.0
    %81 = vmatprep.subr.mxu0 0.0
    %82 = vmatpush1.msra.mxu0 0.0
    %83 = vmatprep.subr.mxu0 0.0
    %84 = vmatpush1.msra.mxu0 0.0
    %85 = vmatprep.subr.mxu0 0.0
    %86 = vmatpush1.msra.mxu0 0.0
    %87 = vmatprep.subr.mxu0 0.0
    %88 = vmatpush1.msra.mxu0 0.0
    %89 = vmatprep.subr.mxu0 0.0
    %90 = vmatpush1.msra.mxu0 0.0
    %91 = vmatprep.subr.mxu0 0.0
    %92 = vmatpush1.msra.mxu0 0.0
    %93 = vmatprep.subr.mxu0 0.0
    %94 = vmatpush1.msra.mxu0 0.0
    %95 = vmatprep.subr.mxu0 0.0
    %96 = vmatpush1.msra.mxu0 0.0
    %97 = vmatprep.subr.mxu0 0.0
    %98 = vmatpush1.msra.mxu0 0.0
    %99 = vmatprep.subr.mxu0 0.0
    %100 = vmatpush1.msra.mxu0 0.0
    %101 = vmatprep.subr.mxu0 0.0
    %102 = vmatpush1.msra.mxu0 0.0
    %103 = vmatprep.subr.mxu0 0.0
    %104 = vmatpush1.msra.mxu0 0.0
    %105 = vmatprep.subr.mxu0 0.0
    %106 = vmatpush1.msra.mxu0 0.0
    %107 = vmatprep.subr.mxu0 0.0
    %108 = vmatpush1.msra.mxu0 0.0
    %109 = vmatprep.subr.mxu0 0.0
    %110 = vmatpush1.msra.mxu0 0.0
    %111 = vmatprep.subr.mxu0 0.0
    %112 = vmatpush1.msra.mxu0 0.0
    %113 = vmatprep.subr.mxu0 0.0
    %114 = vmatpush1.msra.mxu0 0.0
    %115 = vmatprep.subr.mxu0 0.0
    %116 = vmatpush1.msra.mxu0 0.0
    %117 = vmatprep.subr.mxu0 0.0
    %118 = vmatpush1.msra.mxu0 0.0
    %119 = vmatprep.subr.mxu0 0.0
    %120 = vmatpush1.msra.mxu0 0.0
    %121 = vmatprep.subr.mxu0 0.0
    %122 = vmatpush1.msra.mxu0 0.0
    %123 = vmatprep.subr.mxu0 0.0
    %124 = vmatpush1.msra.mxu0 0.0
    %125 = vmatprep.subr.mxu0 0.0
    %126 = vmatpush1.msra.mxu0 0.0
    %127 = vmatprep.subr.mxu0 0.0
    %128 = vmatpush1.msra.mxu0 0.0
    %129 = vmatprep.subr.mxu0 0.0
    %130 = vmatpush1.msra.mxu0 0.0
    %131 = vmatprep.subr.mxu0 0.0
    %132 = vmatpush1.msra.mxu0 0.0
    %133 = vmatprep.subr.mxu0 0.0
    %134 = vmatpush1.msra.mxu0 0.0
    %135 = vmatprep.mubr.f32.mxu0 0.0
    %136 = vmatmul.mubr.f32.gmra.mrb[0].mxu0 %v65
    %v137 = vpop.f32.mrb[0].mxu0
    %v138 = vadd.f32 %v61, %v137
    %v139 = vpop.f32.mrb[0].mxu0
    %140 = vdwg.mxu0
    %v141 = vmax.f32 %v138, 0.0
    %v142 = vld [vmem:[%s3] sm:$0xff]
    %v143 = vld [vmem:[%s3 + $0x8] sm:$0xff]
    %v144 = vld [vmem:[%s3 + $0x10] sm:$0xff]
    %v145 = vld [vmem:[%s3 + $0x18] sm:$0xff]
    %v146 = vld [vmem:[%s4] sm:$0x1]
    %v148 = vlaneseq
    %v149 = vshrl.u32 %v148, 7
    %v150 = vsub.s32 0, %v149
    %v151 = vrot.slane %v146, %v150
    %vm153 = vcmask 261120
    %v155 = vsel %vm153, %v141, 0
    %157 = vmatprep.subr.mxu0 0.0
    %158 = vmatpush1.msra.mxu0 %v142
    %159 = vmatprep.subr.mxu0 0.0
    %160 = vmatpush1.msra.mxu0 %v143
    %161 = vmatprep.subr.mxu0 0.0
    %162 = vmatpush1.msra.mxu0 %v144
    %163 = vmatprep.subr.mxu0 0.0
    %164 = vmatpush1.msra.mxu0 %v145
    %165 = vmatprep.subr.mxu0 0.0
    %166 = vmatpush1.msra.mxu0 0.0
    %167 = vmatprep.subr.mxu0 0.0
    %168 = vmatpush1.msra.mxu0 0.0
    %169 = vmatprep.subr.mxu0 0.0
    %170 = vmatpush1.msra.mxu0 0.0
    %171 = vmatprep.subr.mxu0 0.0
    %172 = vmatpush1.msra.mxu0 0.0
    %173 = vmatprep.subr.mxu0 0.0
    %174 = vmatpush1.msra.mxu0 0.0
    %175 = vmatprep.subr.mxu0 0.0
    %176 = vmatpush1.msra.mxu0 0.0
    %177 = vmatprep.subr.mxu0 0.0
    %178 = vmatpush1.msra.mxu0 0.0
    %179 = vmatprep.subr.mxu0 0.0
    %180 = vmatpush1.msra.mxu0 0.0
    %181 = vmatprep.subr.mxu0 0.0
    %182 = vmatpush1.msra.mxu0 0.0
    %183 = vmatprep.subr.mxu0 0.0
    %184 = vmatpush1.msra.mxu0 0.0
    %185 = vmatprep.subr.mxu0 0.0
    %186 = vmatpush1.msra.mxu0 0.0
    %187 = vmatprep.subr.mxu0 0.0
    %188 = vmatpush1.msra.mxu0 0.0
    %189 = vmatprep.subr.mxu0 0.0
    %190 = vmatpush1.msra.mxu0 0.0
    %191 = vmatprep.subr.mxu0 0.0
    %192 = vmatpush1.msra.mxu0 0.0
    %193 = vmatprep.subr.mxu0 0.0
    %194 = vmatpush1.msra.mxu0 0.0
    %195 = vmatprep.subr.mxu0 0.0
    %196 = vmatpush1.msra.mxu0 0.0
    %197 = vmatprep.subr.mxu0 0.0
    %198 = vmatpush1.msra.mxu0 0.0
    %199 = vmatprep.subr.mxu0 0.0
    %200 = vmatpush1.msra.mxu0 0.0
    %201 = vmatprep.subr.mxu0 0.0
    %202 = vmatpush1.msra.mxu0 0.0
    %203 = vmatprep.subr.mxu0 0.0
    %204 = vmatpush1.msra.mxu0 0.0
    %205 = vmatprep.subr.mxu0 0.0
    %206 = vmatpush1.msra.mxu0 0.0
    %207 = vmatprep.subr.mxu0 0.0
    %208 = vmatpush1.msra.mxu0 0.0
    %209 = vmatprep.subr.mxu0 0.0
    %210 = vmatpush1.msra.mxu0 0.0
    %211 = vmatprep.subr.mxu0 0.0
    %212 = vmatpush1.msra.mxu0 0.0
    %213 = vmatprep.subr.mxu0 0.0
    %214 = vmatpush1.msra.mxu0 0.0
    %215 = vmatprep.subr.mxu0 0.0
    %216 = vmatpush1.msra.mxu0 0.0
    %217 = vmatprep.subr.mxu0 0.0
    %218 = vmatpush1.msra.mxu0 0.0
    %219 = vmatprep.subr.mxu0 0.0
    %220 = vmatpush1.msra.mxu0 0.0
    %221 = vmatprep.mubr.f32.mxu0 0.0
    %222 = vmatmul.mubr.f32.gmra.mrb[0].mxu0 %v155
    %v223 = vpop.f32.mrb[0].mxu0
    %v224 = vadd.f32 %v151, %v223
    %v225 = vpop.f32.mrb[0].mxu0
    %226 = vdwg.mxu0
    %v227 = vmax.f32 %v224, 0.0
    %228 = vxpose.xlu0.b32.start [1/16] %v227, 128
    %229 = vxpose.xlu0.b32.cont [2/16] 0.0, 128
    %230 = vxpose.xlu0.b32.cont [3/16] 0.0, 128
    %231 = vxpose.xlu0.b32.cont [4/16] 0.0, 128
    %232 = vxpose.xlu0.b32.cont [5/16] 0.0, 128
    %233 = vxpose.xlu0.b32.cont [6/16] 0.0, 128
    %234 = vxpose.xlu0.b32.cont [7/16] 0.0, 128
    %235 = vxpose.xlu0.b32.cont [8/16] 0.0, 128
    %236 = vxpose.xlu0.b32.cont [9/16] 0.0, 128
    %237 = vxpose.xlu0.b32.cont [10/16] 0.0, 128
    %238 = vxpose.xlu0.b32.cont [11/16] 0.0, 128
    %239 = vxpose.xlu0.b32.cont [12/16] 0.0, 128
    %240 = vxpose.xlu0.b32.cont [13/16] 0.0, 128
    %241 = vxpose.xlu0.b32.cont [14/16] 0.0, 128
    %242 = vxpose.xlu0.b32.cont [15/16] 0.0, 128
    %243 = vxpose.xlu0.b32.end [16/16] 0.0, 128
    %v244 = vpop.trf.xlu0
    %v245 = vpop.trf.xlu0
    %v246 = vpop.trf.xlu0
    %v247 = vpop.trf.xlu0
    %v248 = vpop.trf.xlu0
    %v249 = vpop.trf.xlu0
    %v250 = vpop.trf.xlu0
    %v251 = vpop.trf.xlu0
    %v252 = vpop.trf.xlu0
    %v253 = vpop.trf.xlu0
    %v254 = vpop.trf.xlu0
    %v255 = vpop.trf.xlu0
    %v256 = vpop.trf.xlu0
    %v257 = vpop.trf.xlu0
    %v258 = vpop.trf.xlu0
    %v259 = vpop.trf.xlu0
    %v260 = vld [vmem:[%s5] sm:$0xff]
    %v261 = vld [vmem:[%s5 + $0x8] sm:$0xff]
    %v262 = vld [vmem:[%s5 + $0x10] sm:$0xff]
    %v263 = vld [vmem:[%s5 + $0x18] sm:$0xff]
    %265 = vset.pattern.permute.xlu0 0
    %266 = vperm.xlu0 %265, %v260
    %v267 = vpop.permute.xlu0 %266
    %270 = vset.pattern.permute.xlu0 0
    %271 = vperm.xlu0 %270, %v261
    %v272 = vpop.permute.xlu0 %271
    %275 = vset.pattern.permute.xlu0 0
    %276 = vperm.xlu0 %275, %v262
    %v277 = vpop.permute.xlu0 %276
    %280 = vset.pattern.permute.xlu0 0
    %281 = vperm.xlu0 %280, %v263
    %v282 = vpop.permute.xlu0 %281
    %v284 = vmul.f32 %v244, %v267
    %v285 = vmul.f32 %v245, %v272
    %v286 = vmul.f32 %v246, %v277
    %v287 = vmul.f32 %v247, %v282
    %vm288 = vcmask 64512
    %v289 = vsel %vm288, %v284, 0.0
    %v290 = vsel %vm288, %v285, 0.0
    %v291 = vadd.f32 %v289, %v290
    %v292 = vsel %vm288, %v286, 0.0
    %v293 = vadd.f32 %v291, %v292
    %v294 = vsel %vm288, %v287, 0.0
    %v295 = vadd.f32 %v293, %v294
    %v296 = vrot.slane %v295, 4
    %v297 = vadd.f32 %v295, %v296
    %v298 = vrot.slane %v297, 2
    %v299 = vadd.f32 %v297, %v298
    %v300 = vrot.slane %v299, 1
    %v301 = vadd.f32 %v299, %v300
    %v302 = vld [vmem:[#allocation2] sm:$0x1]
    %304 = vset.pattern.permute.xlu0 0
    %305 = vperm.xlu0 %304, %v302
    %v306 = vpop.permute.xlu0 %305
    %v308 = vlaneseq
    %v309 = vshrl.u32 %v308, 7
    %v310 = vsub.s32 0, %v309
    %v311 = vrot.slane %v306, %v310
    %v312 = vadd.f32 %v301, %v311
    %v313 = vsub.f32 0.0, %v312
    %v314 = vmul.f32 %v313, 1.442695
    %v315 = vpow.pop %v314
    %v316 = vadd.f32 %v315, 1.0
    %v317 = vrcp.pop %v316
    %v318 = vmul.f32 1.0, %v317
    %vm319 = vcmask 57344
    %320 = vst.msk [vmem:[#allocation8] sm:$0x1] %vm319, %v318
    // Predicated region
    $region38: #{tpu_custom_call.1} parent=1 // pred_check
      _
    $region39: #{tpu_custom_call.1} parent=1 // pred_check_branch
      %322 = sbr.rel (0) target = $region41
    $region40: #{tpu_custom_call.1} parent=1 // pred_region
      %s324 = ssub.s32 16, 16
      %325 = vsyncadd [#allocation5], %s324
      %s327 = sshll.u32 [#allocation8], 4
      %s328 = int_to_ptr.vmem [resolvable:$true] %s327
      %330 = dma.vmem_to_hbm [thread:$0]  %s328, 16, %s7, [#allocation5]
    $region41: #{tpu_custom_call.1} parent=1 // pred_fallthru
      _
    // Predicated region
    $region42: #{tpu_custom_call.1} parent=1 // pred_check
      _
    $region43: #{tpu_custom_call.1} parent=1 // pred_check_branch
      %332 = sbr.rel (0) target = $region45
    $region44: #{tpu_custom_call.1} parent=1 // pred_region
      %333 = dma.done [#allocation5], 16
    $region45: #{tpu_custom_call.1} parent=1 // pred_fallthru
      _
    %334 = vsyncpa [#allocation4], 1
    %335 = vsyncpa [#allocation7], 1
    %336 = vsyncpa [#allocation5], 1

</llo_original>
